<compile_context>
chip_gen: v6e
topology: v6e:2x2x1
jax: 0.10.0
libtpu: 0.0.40
codegen_flags: <defaults>
</compile_context>

<pallas_src>
import jax
import jax.numpy as jnp
from jax import lax
from jax.experimental import pallas as pl
from jax.experimental.pallas import tpu as pltpu


def _round_up(a, m):
    return ((a + m - 1) // m) * m


def ann_kernel(x_ref, w1_ref, b1_ref, w2_ref, b2_ref, o_ref):
    x = x_ref[...]                       # (TILE_B, 5)
    w1 = w1_ref[...]                     # (5, 12)
    b1 = b1_ref[...]                     # (1, 12)
    w2 = w2_ref[...]                     # (1, 12)
    b2 = b2_ref[0, 0]                    # f32 scalar from SMEM

    # Layer 1 on the MXU: (TILE_B, 5) @ (5, 12) -> (TILE_B, 12), f32 accumulate.
    h = jnp.dot(x, w1, preferred_element_type=jnp.float32) + b1
    h = jnp.maximum(h, 0.0)              # ReLU on the VPU

    # Layer 2 as an NT matmul: contract w2 dim 1 with h dim 1 -> (1, TILE_B).
    # Batch lands on the lane axis, so the store below is lane-dense.
    out_row = lax.dot_general(
        w2, h,
        dimension_numbers=(((1,), (1,)), ((), ())),
        preferred_element_type=jnp.float32,
    ) + b2                               # (1, TILE_B)

    o_ref[...] = out_row.astype(o_ref.dtype)


def ann_forward(x, w1, b1, w2, b2, *, tile_b=8192):
    B, f_in = x.shape
    hidden = w1.shape[1]
    assert w1.shape == (f_in, hidden)
    assert b1.shape == (1, hidden)
    assert w2.shape == (1, hidden)
    assert b2.shape == (1, 1)

    # Tile sizing:
    #  - multiple of 128 so the (1, tile_b) output block is lane-dense.
    #  - capped so the grid keeps >= 2 steps when B allows it (v7x megacore)
    #    and so tiny B does not request an absurdly oversized block.
    tile_b = max(128, (tile_b // 128) * 128)
    cap = max(128, _round_up(pl.cdiv(B, 2), 128))
    tile_b = min(tile_b, cap)
    num_tiles = pl.cdiv(B, tile_b)

    cost = pl.CostEstimate(
        flops=2 * B * (f_in * hidden + hidden),
        transcendentals=0,
        # x blocks are lane-padded 5 -> 128 in VMEM, so the DMA moves
        # tile_b * 128 f32 per step; output writes B f32; weights once.
        bytes_accessed=(num_tiles * tile_b * 128 + num_tiles * tile_b
                        + f_in * hidden + 2 * hidden + 1) * 4,
    )

    out = pl.pallas_call(
        ann_kernel,
        out_shape=jax.ShapeDtypeStruct((1, B), jnp.float32),
        grid=(num_tiles,),
        in_specs=[
            # x: tiled over the batch (rows); double-buffered by the pipeline.
            # Ragged tail block handled by Pallas (no wrapper-side pad).
            pl.BlockSpec((tile_b, f_in), lambda i: (i, 0)),
            # Weights/biases: constant block index -> stay resident in VMEM.
            pl.BlockSpec((f_in, hidden), lambda i: (0, 0)),
            pl.BlockSpec((1, hidden), lambda i: (0, 0)),
            pl.BlockSpec((1, hidden), lambda i: (0, 0)),
            # b2: single scalar in SMEM.
            pl.BlockSpec(memory_space=pltpu.MemorySpace.SMEM),
        ],
        # Lane-dense output: each grid step writes a (1, tile_b) row slab;
        # the tail block's out-of-range lanes are masked on writeback.
        out_specs=pl.BlockSpec((1, tile_b), lambda i: (0, i)),
        compiler_params=pltpu.CompilerParams(
            dimension_semantics=("parallel",),
            # Explicit limit: v5e's default scoped VMEM is only 16 MiB.
            vmem_limit_bytes=32 * 1024 * 1024,
        ),
        cost_estimate=cost,
    )(x, w1, b1, w2, b2)

    # (1, B) -> (B, 1): identical flat element order => free bitcast,
    # no extra HBM pass and no slicing needed.
    return out.reshape(B, 1)


def init_params(key):
    # Deterministic init mimicking PyTorch Linear (uniform(-1/sqrt(fan_in), ...)).
    k1, k2, k3, k4 = jax.random.split(key, 4)
    bound1 = 1.0 / jnp.sqrt(5.0)
    bound2 = 1.0 / jnp.sqrt(12.0)
    w1 = jax.random.uniform(k1, (5, 12), jnp.float32, -bound1, bound1)   # linear1.weight.T
    b1 = jax.random.uniform(k2, (1, 12), jnp.float32, -bound1, bound1)
    w2 = jax.random.uniform(k3, (1, 12), jnp.float32, -bound2, bound2)   # linear2.weight
    b2 = jax.random.uniform(k4, (1, 1), jnp.float32, -bound2, bound2)
    return w1, b1, w2, b2


if __name__ == "__main__":
    key = jax.random.PRNGKey(0)
    kx, kp = jax.random.split(key)

    B = 1000                                            # -> 2 grid tiles + a ragged tail
    x = jax.random.normal(kx, (B, 5), jnp.float32)
    w1, b1, w2, b2 = init_params(kp)

    out = ann_forward(x, w1, b1, w2, b2)
    out = jax.block_until_ready(out)

    # Pure-JAX reference of the PyTorch forward.
    ref = jnp.maximum(x @ w1 + b1, 0.0) @ w2.T + b2     # (B, 1)

    assert out.shape == (B, 1)
    assert jnp.allclose(out, ref, atol=1e-4, rtol=1e-4), (
        float(jnp.max(jnp.abs(out - ref))))

    print("KERNEL_OK")
</pallas_src>

<mosaic_0001>
module attributes {stable_mosaic.version = 11 : i64} {
  func.func @ann_kernel(%arg0: i32, %arg1: memref<512x5xf32, #tpu.memory_space<vmem>>, %arg2: memref<5x12xf32, #tpu.memory_space<vmem>>, %arg3: memref<1x12xf32, #tpu.memory_space<vmem>>, %arg4: memref<1x12xf32, #tpu.memory_space<vmem>>, %arg5: memref<1x1xf32, #tpu.memory_space<smem>>, %arg6: memref<1x512xf32, #tpu.memory_space<vmem>>) attributes {dimension_semantics = [#tpu.dimension_semantics<parallel>], iteration_bounds = array<i64: 2>, scalar_prefetch = 0 : i64, scratch_operands = 0 : i64, tpu.core_type = #tpu.core_type<tc>, window_params = [{transform_indices = @transform_0, window_bounds = array<i64: 512, 5>}, {pipeline_mode = #tpu.pipeline_mode<synchronous>, transform_indices = @transform_1, window_bounds = array<i64: 5, 12>}, {pipeline_mode = #tpu.pipeline_mode<synchronous>, transform_indices = @transform_2, window_bounds = array<i64: 1, 12>}, {pipeline_mode = #tpu.pipeline_mode<synchronous>, transform_indices = @transform_3, window_bounds = array<i64: 1, 12>}, {transform_indices = @transform_4, window_bounds = array<i64: 1, 1>}, {transform_indices = @transform_5, window_bounds = array<i64: 1, 512>}]} {
    %c0 = arith.constant 0 : index
    %c0_0 = arith.constant 0 : index
    %0 = vector.load %arg1[%c0, %c0_0] : memref<512x5xf32, #tpu.memory_space<vmem>>, vector<512x5xf32>
    %c0_1 = arith.constant 0 : index
    %c0_2 = arith.constant 0 : index
    %1 = vector.load %arg2[%c0_1, %c0_2] : memref<5x12xf32, #tpu.memory_space<vmem>>, vector<5x12xf32>
    %c0_3 = arith.constant 0 : index
    %c0_4 = arith.constant 0 : index
    %2 = vector.load %arg3[%c0_3, %c0_4] : memref<1x12xf32, #tpu.memory_space<vmem>>, vector<1x12xf32>
    %c0_5 = arith.constant 0 : index
    %c0_6 = arith.constant 0 : index
    %3 = vector.load %arg4[%c0_5, %c0_6] : memref<1x12xf32, #tpu.memory_space<vmem>>, vector<1x12xf32>
    %c0_7 = arith.constant 0 : index
    %c0_8 = arith.constant 0 : index
    %4 = memref.load %arg5[%c0_7, %c0_8] : memref<1x1xf32, #tpu.memory_space<smem>>
    %cst = arith.constant dense<0.000000e+00> : vector<512x12xf32>
    %5 = tpu.matmul %0, %1, %cst {dimension_numbers = #tpu.dot_dimension_numbers<[1], [0], [0], [1], [0, 0, 1, 1], [], []>} : vector<512x5xf32>, vector<5x12xf32>, vector<512x12xf32> -> vector<512x12xf32>
    %6 = vector.broadcast %2 : vector<1x12xf32> to vector<512x12xf32>
    %7 = arith.addf %5, %6 : vector<512x12xf32>
    %cst_9 = arith.constant 0.000000e+00 : f32
    %8 = vector.broadcast %cst_9 : f32 to vector<512x12xf32>
    %9 = arith.maximumf %7, %8 : vector<512x12xf32>
    %cst_10 = arith.constant dense<0.000000e+00> : vector<1x512xf32>
    %10 = tpu.matmul %3, %9, %cst_10 {dimension_numbers = #tpu.dot_dimension_numbers<[1], [1], [0], [0], [0, 0, 1, 0], [], []>} : vector<1x12xf32>, vector<512x12xf32>, vector<1x512xf32> -> vector<1x512xf32>
    %11 = vector.broadcast %4 : f32 to vector<1x512xf32>
    %12 = arith.addf %10, %11 : vector<1x512xf32>
    %c0_11 = arith.constant 0 : index
    %c0_12 = arith.constant 0 : index
    %13 = vector.load %arg6[%c0_11, %c0_12] : memref<1x512xf32, #tpu.memory_space<vmem>>, vector<1x512xf32>
    tpu.vector_store %arg6[%c0_11, %c0_12], %12 {strides = array<i32>} : memref<1x512xf32, #tpu.memory_space<vmem>>, vector<1x512xf32>,
    return
  }
  func.func @transform_0(%arg0: i32) -> (i32, i32) {
    %c0_i32 = arith.constant 0 : i32
    %c0_i32_0 = arith.constant 0 : i32
    return %arg0, %c0_i32 : i32, i32
  }
  func.func @transform_1(%arg0: i32) -> (i32, i32) {
    %c0_i32 = arith.constant 0 : i32
    %c0_i32_0 = arith.constant 0 : i32
    %c0_i32_1 = arith.constant 0 : i32
    return %c0_i32, %c0_i32_0 : i32, i32
  }
  func.func @transform_2(%arg0: i32) -> (i32, i32) {
    %c0_i32 = arith.constant 0 : i32
    %c0_i32_0 = arith.constant 0 : i32
    %c0_i32_1 = arith.constant 0 : i32
    return %c0_i32, %c0_i32_0 : i32, i32
  }
  func.func @transform_3(%arg0: i32) -> (i32, i32) {
    %c0_i32 = arith.constant 0 : i32
    %c0_i32_0 = arith.constant 0 : i32
    %c0_i32_1 = arith.constant 0 : i32
    return %c0_i32, %c0_i32_0 : i32, i32
  }
  func.func @transform_4(%arg0: i32) -> (i32, i32) {
    %c0_i32 = arith.constant 0 : i32
    %c0_i32_0 = arith.constant 0 : i32
    %c0_i32_1 = arith.constant 0 : i32
    return %c0_i32, %c0_i32_0 : i32, i32
  }
  func.func @transform_5(%arg0: i32) -> (i32, i32) {
    %c0_i32 = arith.constant 0 : i32
    %c0_i32_0 = arith.constant 0 : i32
    return %c0_i32, %arg0 : i32, i32
  }
}

</mosaic_0001>

<llo_original>
// kernel: tpu_custom_call.1
$region0: #{tpu_custom_call.1}
  #allocation0 [shape = 'u32[]', space=smem, size = 0x4, offset = 0x4, fixed_abs, tag = 'smem constant byte address 0x4 - core index']
  #allocation1 [shape = 'u32[144,128]{1,0:T(1,128)}', space=vmem, size = 0x12000, scoped, tag = 'internal scratch']
  #allocation2 [shape = 'f32[1,1]{1,0:T(1,128)S(6)}', space=smem, size = 0x200, scoped, tag = 'scoped memory for tpu_custom_call.1']
  %s0 = inlined_call_operand.vmem [shape: f32[1000,5], index: 0, kind: input, shape index: {}]
  %s1 = inlined_call_operand.vmem [shape: f32[5,12], index: 1, kind: input, shape index: {}]
  %s2 = inlined_call_operand.vmem [shape: f32[1,12], index: 2, kind: input, shape index: {}]
  %s3 = inlined_call_operand.vmem [shape: f32[1,12], index: 3, kind: input, shape index: {}]
  %s4 = inlined_call_operand.<no memory space> [shape: f32[1,1], index: 4, kind: input, shape index: {}]
  %s5 = inlined_call_operand.hbm [shape: f32[1,1000], index: 5, kind: output, shape index: {}]
  %s6 = sld [smem:[#allocation0]]
  $region53: #{tpu_custom_call.1} parent=0
    _
  %s8 = ssub.s32 1, %s6
  %s9 = scalar_select 0, %s8, %s6
  %10 = sst [smem:[#allocation2]] %s4
  $region1: #{tpu_custom_call.1} parent=0
    #allocation3 [shape = 'u8[4096]{0}', space=vmem, size = 0x1000, scoped, tag = 'output window, operand 0']
    #allocation4 [shape = 's32[2]{0}', space=sflag, size = 0x8, scoped, tag = 'scoped memory for tpu_custom_call.1']
    %11 = vsyncpa [#allocation4], 0
    %s12 = scalar_lea.sflag [#allocation4], 1
    %13 = vsyncpa %s12, 0
    loop: start=0, step=1, limit=4
    $region2: #{tpu_custom_call.1} parent=1 // loop_pre_header
      _
    $region3: #{tpu_custom_call.1} parent=1 // loop_header
      %s15 = sphi 0, %s19
      %p16 = scmp.ge.s32.totalorder %s15, 4
      %s25 = sphi 0, %s27
      %s28 = sphi 0, %s25
      %s29 = sphi 0, %s28
      %s45 = sphi 0, %s29
      %s49 = sphi 0, %s49
      %s51 = sphi 0, %s49
      %s52 = sphi 0, %s51
      %s66 = sphi 0, %s52
      %s70 = sphi 0, %s70
      %s72 = sphi 0, %s70
      %s73 = sphi 0, %s72
      %s87 = sphi 0, %s73
      %s91 = sphi 0, %s91
      %s93 = sphi 0, %s91
      %s94 = sphi 0, %s93
      %s108 = sphi 0, %s94
      %s112 = sphi 0, %s112
      %s114 = sphi 0, %s112
      %s115 = sphi 0, %s114
      %s129 = sphi 0, %s115
      %s135 = sphi 0, %s137
      %s138 = sphi 0, %s135
      %s139 = sphi 0, %s138
      %s155 = sphi 0, %s139
    $region4: #{tpu_custom_call.1} parent=1 // loop_header_branch
      %18 = sbr.rel (%p16) target = $region8
    $region5: #{tpu_custom_call.1} parent=1 // loop_body
      %s20 = ssub.s32 %s15, 1
      %s21 = ssub.s32 %s15, 2
      %s22 = sadd.s32 %s15, 1
      %s23 = ssub.s32 %s15, %s22
      %p24 = scmp.eq.s32.totalorder %s23, 0
      %s26 = sadd.s32 %s25, 1
      %s27 = scalar_select %p24, %s25, %s26
      %p30 = pneg %p24
      %p31 = scmp.eq.s32.totalorder %s15, 1
      %p32 = por %p30, %p31
      %p33 = scmp.ne.s32.totalorder %s25, %s28
      %p34 = scmp.eq.s32.totalorder %s15, 0
      %p35 = por %p33, %p34
      %p36 = scmp.ne.s32.totalorder %s25, %s28
      %p37 = scmp.eq.s32.totalorder %s20, 1
      %p38 = por %p36, %p37
      %p39 = scmp.ne.s32.totalorder %s28, %s29
      %p40 = scmp.eq.s32.totalorder %s20, 0
      %p41 = por %p39, %p40
      %p42 = scmp.ne.s32.totalorder %s28, %s29
      %p43 = scmp.eq.s32.totalorder %s21, 1
      %p44 = por %p42, %p43
      %p46 = scmp.ne.s32.totalorder %s29, %s45
      %p47 = scmp.eq.s32.totalorder %s21, 0
      %p48 = por %p46, %p47
      %s50 = sadd.s32 %s49, 1
      %p53 = scmp.eq.s32.totalorder %s15, 1
      %p54 = scmp.ne.s32.totalorder %s49, %s51
      %p55 = scmp.eq.s32.totalorder %s15, 0
      %p56 = por %p54, %p55
      %p57 = scmp.ne.s32.totalorder %s49, %s51
      %p58 = scmp.eq.s32.totalorder %s20, 1
      %p59 = por %p57, %p58
      %p60 = scmp.ne.s32.totalorder %s51, %s52
      %p61 = scmp.eq.s32.totalorder %s20, 0
      %p62 = por %p60, %p61
      %p63 = scmp.ne.s32.totalorder %s51, %s52
      %p64 = scmp.eq.s32.totalorder %s21, 1
      %p65 = por %p63, %p64
      %p67 = scmp.ne.s32.totalorder %s52, %s66
      %p68 = scmp.eq.s32.totalorder %s21, 0
      %p69 = por %p67, %p68
      %s71 = sadd.s32 %s70, 1
      %p74 = scmp.eq.s32.totalorder %s15, 1
      %p75 = scmp.ne.s32.totalorder %s70, %s72
      %p76 = scmp.eq.s32.totalorder %s15, 0
      %p77 = por %p75, %p76
      %p78 = scmp.ne.s32.totalorder %s70, %s72
      %p79 = scmp.eq.s32.totalorder %s20, 1
      %p80 = por %p78, %p79
      %p81 = scmp.ne.s32.totalorder %s72, %s73
      %p82 = scmp.eq.s32.totalorder %s20, 0
      %p83 = por %p81, %p82
      %p84 = scmp.ne.s32.totalorder %s72, %s73
      %p85 = scmp.eq.s32.totalorder %s21, 1
      %p86 = por %p84, %p85
      %p88 = scmp.ne.s32.totalorder %s73, %s87
      %p89 = scmp.eq.s32.totalorder %s21, 0
      %p90 = por %p88, %p89
      %s92 = sadd.s32 %s91, 1
      %p95 = scmp.eq.s32.totalorder %s15, 1
      %p96 = scmp.ne.s32.totalorder %s91, %s93
      %p97 = scmp.eq.s32.totalorder %s15, 0
      %p98 = por %p96, %p97
      %p99 = scmp.ne.s32.totalorder %s91, %s93
      %p100 = scmp.eq.s32.totalorder %s20, 1
      %p101 = por %p99, %p100
      %p102 = scmp.ne.s32.totalorder %s93, %s94
      %p103 = scmp.eq.s32.totalorder %s20, 0
      %p104 = por %p102, %p103
      %p105 = scmp.ne.s32.totalorder %s93, %s94
      %p106 = scmp.eq.s32.totalorder %s21, 1
      %p107 = por %p105, %p106
      %p109 = scmp.ne.s32.totalorder %s94, %s108
      %p110 = scmp.eq.s32.totalorder %s21, 0
      %p111 = por %p109, %p110
      %s113 = sadd.s32 %s112, 1
      %p116 = scmp.eq.s32.totalorder %s15, 1
      %p117 = scmp.ne.s32.totalorder %s112, %s114
      %p118 = scmp.eq.s32.totalorder %s15, 0
      %p119 = por %p117, %p118
      %p120 = scmp.ne.s32.totalorder %s112, %s114
      %p121 = scmp.eq.s32.totalorder %s20, 1
      %p122 = por %p120, %p121
      %p123 = scmp.ne.s32.totalorder %s114, %s115
      %p124 = scmp.eq.s32.totalorder %s20, 0
      %p125 = por %p123, %p124
      %p126 = scmp.ne.s32.totalorder %s114, %s115
      %p127 = scmp.eq.s32.totalorder %s21, 1
      %p128 = por %p126, %p127
      %p130 = scmp.ne.s32.totalorder %s115, %s129
      %p131 = scmp.eq.s32.totalorder %s21, 0
      %p132 = por %p130, %p131
      %s133 = ssub.s32 %s15, %s22
      %p134 = scmp.eq.s32.totalorder %s133, 0
      %s136 = sadd.s32 %s135, 1
      %s137 = scalar_select %p134, %s135, %s136
      %p140 = pneg %p134
      %p141 = scmp.eq.s32.totalorder %s15, 1
      %p142 = por %p140, %p141
      %p143 = scmp.ne.s32.totalorder %s135, %s138
      %p144 = scmp.eq.s32.totalorder %s15, 0
      %p145 = por %p143, %p144
      %p146 = scmp.ne.s32.totalorder %s135, %s138
      %p147 = scmp.eq.s32.totalorder %s20, 1
      %p148 = por %p146, %p147
      %p149 = scmp.ne.s32.totalorder %s138, %s139
      %p150 = scmp.eq.s32.totalorder %s20, 0
      %p151 = por %p149, %p150
      %p152 = scmp.ne.s32.totalorder %s138, %s139
      %p153 = scmp.eq.s32.totalorder %s21, 1
      %p154 = por %p152, %p153
      %p156 = scmp.ne.s32.totalorder %s139, %s155
      %p157 = scmp.eq.s32.totalorder %s21, 0
      %p158 = por %p156, %p157
      %p159 = scmp.le.s32.totalorder 1, %s15
      %p160 = scmp.lt.s32.totalorder %s15, 3
      %p161 = pnand %p159, %p160
      %p162 = pneg %p161
      // Predicated region
      $region9: #{tpu_custom_call.1} parent=5 // pred_check
        _
      $region10: #{tpu_custom_call.1} parent=5 // pred_check_branch
        %164 = sbr.rel (%p161) target = $region12
      $region11: #{tpu_custom_call.1} parent=5 // pred_region
        %s165 = ssub.s32 %s15, 1
        // Predicated region
        $region13: #{tpu_custom_call.1} parent=11 // pred_check
          %p166 = pneg %p62
        $region14: #{tpu_custom_call.1} parent=11 // pred_check_branch
          %168 = sbr.rel (%p166) target = $region16
        $region15: #{tpu_custom_call.1} parent=11 // pred_region
          _
        $region16: #{tpu_custom_call.1} parent=11 // pred_fallthru
          _
        // Predicated region
        $region17: #{tpu_custom_call.1} parent=11 // pred_check
          %p169 = pneg %p83
        $region18: #{tpu_custom_call.1} parent=11 // pred_check_branch
          %171 = sbr.rel (%p169) target = $region20
        $region19: #{tpu_custom_call.1} parent=11 // pred_region
          _
        $region20: #{tpu_custom_call.1} parent=11 // pred_fallthru
          _
        // Predicated region
        $region21: #{tpu_custom_call.1} parent=11 // pred_check
          %p172 = pneg %p104
        $region22: #{tpu_custom_call.1} parent=11 // pred_check_branch
          %174 = sbr.rel (%p172) target = $region24
        $region23: #{tpu_custom_call.1} parent=11 // pred_region
          _
        $region24: #{tpu_custom_call.1} parent=11 // pred_fallthru
          _
        // Predicated region
        $region25: #{tpu_custom_call.1} parent=11 // pred_check
          %p175 = pneg %p125
        $region26: #{tpu_custom_call.1} parent=11 // pred_check_branch
          %177 = sbr.rel (%p175) target = $region28
        $region27: #{tpu_custom_call.1} parent=11 // pred_region
          _
        $region28: #{tpu_custom_call.1} parent=11 // pred_fallthru
          _
      $region12: #{tpu_custom_call.1} parent=5 // pred_fallthru
        _
      %p178 = scmp.lt.s32.totalorder %s15, 2
      // Predicated region
      $region29: #{tpu_custom_call.1} parent=5 // pred_check
        %p179 = pneg %p178
      $region30: #{tpu_custom_call.1} parent=5 // pred_check_branch
        %181 = sbr.rel (%p179) target = $region32
      $region31: #{tpu_custom_call.1} parent=5 // pred_region
        // Predicated region
        $region33: #{tpu_custom_call.1} parent=31 // pred_check
          %p182 = pneg %p35
        $region34: #{tpu_custom_call.1} parent=31 // pred_check_branch
          %184 = sbr.rel (%p182) target = $region36
        $region35: #{tpu_custom_call.1} parent=31 // pred_region
          %s185 = smul.u32 64, %s15
          %s186 = ssub.s32 125, %s185
          %p187 = scmp.lt.s32.totalorder %s186, 64
          %s188 = scalar_select %p187, %s186, 64
          %s189 = smul.u32 128, %s188
          %p190 = scmp.lt.s32.totalorder %s185, 124
          %s191 = scalar_select %p190, %s185, 124
          %s192 = smul.addr %s191, 8
          %s193 = scalar_lea.vmem %s0, %s192
          %s194 = smul.u32 64, %s15
          %s195 = ssub.s32 125, %s194
          %p196 = scmp.lt.s32.totalorder %s195, 64
          %s197 = scalar_select %p196, %s195, 64
          %s198 = smul.u32 128, %s197
        $region36: #{tpu_custom_call.1} parent=31 // pred_fallthru
          _
      $region32: #{tpu_custom_call.1} parent=5 // pred_fallthru
        _
      %p199 = scmp.le.s32.totalorder 1, %s15
      %p200 = scmp.lt.s32.totalorder %s15, 3
      %p201 = pnand %p199, %p200
      %p202 = pneg %p201
      // Predicated region
      $region37: #{tpu_custom_call.1} parent=5 // pred_check
        _
      $region38: #{tpu_custom_call.1} parent=5 // pred_check_branch
        %204 = sbr.rel (%p201) target = $region40
      $region39: #{tpu_custom_call.1} parent=5 // pred_region
        %s205 = ssub.s32 %s15, 1
        %s206 = smul.u32 64, %s20
        %s207 = ssub.s32 125, %s206
        %p208 = scmp.lt.s32.totalorder %s207, 64
        %s209 = scalar_select %p208, %s207, 64
        %s210 = smul.u32 128, %s209
        %p211 = scmp.lt.s32.totalorder %s206, 124
        %s212 = scalar_select %p211, %s206, 124
        %s213 = smul.addr %s212, 8
        %s214 = scalar_lea.vmem %s0, %s213
        %p215 = pneg %p41
        %p216 = pneg %p38
        %p217 = pneg %p62
        %p218 = pneg %p59
        %p219 = pneg %p83
        %p220 = pneg %p80
        %p221 = pneg %p104
        %p222 = pneg %p101
        %p223 = pneg %p125
        %p224 = pneg %p122
        %p225 = pneg %p151
        %p226 = pneg %p148
        %s227 = sand.u32 %s138, 1
        %s228 = scalar_lea.sflag [#allocation4], %s227
        %s229 = sand.u32 %s138, 1
        %s230 = smul.addr %s229, 4
        %s231 = scalar_lea.vmem [#allocation3], %s230
        %s232 = smul.u32 64, %s20
        %s233 = ssub.s32 125, %s232
        %p234 = scmp.lt.s32.totalorder %s233, 64
        %s235 = scalar_select %p234, %s233, 64
        %s236 = smul.u32 128, %s235
        %p237 = scmp.lt.s32.totalorder %s232, 124
        %s238 = scalar_select %p237, %s232, 124
        %s239 = smul.addr %s238, 8
        %s240 = scalar_lea.vmem %s0, %s239
        %s241 = smul.u32 64, %s20
        %s242 = ssub.s32 125, %s241
        %p243 = scmp.lt.s32.totalorder %s242, 64
        %s244 = scalar_select %p243, %s242, 64
        %s245 = smul.u32 128, %s244
        %s246 = smul.u32 4, %s20
        %v247 = vld [vmem:[%s240] sm:$0xff]
        %v248 = vld [vmem:[%s240 + $0x8] sm:$0xff]
        %v249 = vld [vmem:[%s240 + $0x10] sm:$0xff]
        %v250 = vld [vmem:[%s240 + $0x18] sm:$0xff]
        %v251 = vld [vmem:[%s240 + $0x20] sm:$0xff]
        %v252 = vld [vmem:[%s240 + $0x28] sm:$0xff]
        %v253 = vld [vmem:[%s240 + $0x30] sm:$0xff]
        %v254 = vld [vmem:[%s240 + $0x38] sm:$0xff]
        %v255 = vld [vmem:[%s240 + $0x40] sm:$0xff]
        %v256 = vld [vmem:[%s240 + $0x48] sm:$0xff]
        %v257 = vld [vmem:[%s240 + $0x50] sm:$0xff]
        %v258 = vld [vmem:[%s240 + $0x58] sm:$0xff]
        %v259 = vld [vmem:[%s240 + $0x60] sm:$0xff]
        %v260 = vld [vmem:[%s240 + $0x68] sm:$0xff]
        %v261 = vld [vmem:[%s240 + $0x70] sm:$0xff]
        %v262 = vld [vmem:[%s240 + $0x78] sm:$0xff]
        %v263 = vld [vmem:[%s240 + $0x80] sm:$0xff]
        %v264 = vld [vmem:[%s240 + $0x88] sm:$0xff]
        %v265 = vld [vmem:[%s240 + $0x90] sm:$0xff]
        %v266 = vld [vmem:[%s240 + $0x98] sm:$0xff]
        %v267 = vld [vmem:[%s240 + $0xa0] sm:$0xff]
        %v268 = vld [vmem:[%s240 + $0xa8] sm:$0xff]
        %v269 = vld [vmem:[%s240 + $0xb0] sm:$0xff]
        %v270 = vld [vmem:[%s240 + $0xb8] sm:$0xff]
        %v271 = vld [vmem:[%s240 + $0xc0] sm:$0xff]
        %v272 = vld [vmem:[%s240 + $0xc8] sm:$0xff]
        %v273 = vld [vmem:[%s240 + $0xd0] sm:$0xff]
        %v274 = vld [vmem:[%s240 + $0xd8] sm:$0xff]
        %v275 = vld [vmem:[%s240 + $0xe0] sm:$0xff]
        %v276 = vld [vmem:[%s240 + $0xe8] sm:$0xff]
        %v277 = vld [vmem:[%s240 + $0xf0] sm:$0xff]
        %v278 = vld [vmem:[%s240 + $0xf8] sm:$0xff]
        %v279 = vld [vmem:[%s240 + $0x100] sm:$0xff]
        %v280 = vld [vmem:[%s240 + $0x108] sm:$0xff]
        %v281 = vld [vmem:[%s240 + $0x110] sm:$0xff]
        %v282 = vld [vmem:[%s240 + $0x118] sm:$0xff]
        %v283 = vld [vmem:[%s240 + $0x120] sm:$0xff]
        %v284 = vld [vmem:[%s240 + $0x128] sm:$0xff]
        %v285 = vld [vmem:[%s240 + $0x130] sm:$0xff]
        %v286 = vld [vmem:[%s240 + $0x138] sm:$0xff]
        %v287 = vld [vmem:[%s240 + $0x140] sm:$0xff]
        %v288 = vld [vmem:[%s240 + $0x148] sm:$0xff]
        %v289 = vld [vmem:[%s240 + $0x150] sm:$0xff]
        %v290 = vld [vmem:[%s240 + $0x158] sm:$0xff]
        %v291 = vld [vmem:[%s240 + $0x160] sm:$0xff]
        %v292 = vld [vmem:[%s240 + $0x168] sm:$0xff]
        %v293 = vld [vmem:[%s240 + $0x170] sm:$0xff]
        %v294 = vld [vmem:[%s240 + $0x178] sm:$0xff]
        %v295 = vld [vmem:[%s240 + $0x180] sm:$0xff]
        %v296 = vld [vmem:[%s240 + $0x188] sm:$0xff]
        %v297 = vld [vmem:[%s240 + $0x190] sm:$0xff]
        %v298 = vld [vmem:[%s240 + $0x198] sm:$0xff]
        %v299 = vld [vmem:[%s240 + $0x1a0] sm:$0xff]
        %v300 = vld [vmem:[%s240 + $0x1a8] sm:$0xff]
        %v301 = vld [vmem:[%s240 + $0x1b0] sm:$0xff]
        %v302 = vld [vmem:[%s240 + $0x1b8] sm:$0xff]
        %v303 = vld [vmem:[%s240 + $0x1c0] sm:$0xff]
        %v304 = vld [vmem:[%s240 + $0x1c8] sm:$0xff]
        %v305 = vld [vmem:[%s240 + $0x1d0] sm:$0xff]
        %v306 = vld [vmem:[%s240 + $0x1d8] sm:$0xff]
        %v307 = vld [vmem:[%s240 + $0x1e0] sm:$0xff]
        %v308 = vld [vmem:[%s240 + $0x1e8] sm:$0xff]
        %v309 = vld [vmem:[%s240 + $0x1f0] sm:$0xff]
        %v310 = vld [vmem:[%s240 + $0x1f8] sm:$0xff]
        %v311 = vld [vmem:[%s1] sm:$0x1f]
        %v312 = vld [vmem:[%s2] sm:$0x1]
        %v313 = vld [vmem:[%s3] sm:$0x1]
        %s314 = sld [smem:[#allocation2]]
        %v316 = vlaneseq
        %v317 = vshrl.u32 %v316, 7
        %v318 = vsub.s32 0, %v317
        %v319 = vrot.slane %v312, %v318
        %vm321 = vcmask 39936
        %v323 = vsel %vm321, %v247, 0
        %v326 = vsel %vm321, %v248, 0
        %v329 = vsel %vm321, %v249, 0
        %v332 = vsel %vm321, %v250, 0
        %v335 = vsel %vm321, %v251, 0
        %v338 = vsel %vm321, %v252, 0
        %v341 = vsel %vm321, %v253, 0
        %v344 = vsel %vm321, %v254, 0
        %v347 = vsel %vm321, %v255, 0
        %v350 = vsel %vm321, %v256, 0
        %v353 = vsel %vm321, %v257, 0
        %v356 = vsel %vm321, %v258, 0
        %v359 = vsel %vm321, %v259, 0
        %v362 = vsel %vm321, %v260, 0
        %v365 = vsel %vm321, %v261, 0
        %v368 = vsel %vm321, %v262, 0
        %v371 = vsel %vm321, %v263, 0
        %v374 = vsel %vm321, %v264, 0
        %v377 = vsel %vm321, %v265, 0
        %v380 = vsel %vm321, %v266, 0
        %v383 = vsel %vm321, %v267, 0
        %v386 = vsel %vm321, %v268, 0
        %v389 = vsel %vm321, %v269, 0
        %v392 = vsel %vm321, %v270, 0
        %v395 = vsel %vm321, %v271, 0
        %v398 = vsel %vm321, %v272, 0
        %v401 = vsel %vm321, %v273, 0
        %v404 = vsel %vm321, %v274, 0
        %v407 = vsel %vm321, %v275, 0
        %v410 = vsel %vm321, %v276, 0
        %v413 = vsel %vm321, %v277, 0
        %v416 = vsel %vm321, %v278, 0
        %v419 = vsel %vm321, %v279, 0
        %v422 = vsel %vm321, %v280, 0
        %v425 = vsel %vm321, %v281, 0
        %v428 = vsel %vm321, %v282, 0
        %v431 = vsel %vm321, %v283, 0
        %v434 = vsel %vm321, %v284, 0
        %v437 = vsel %vm321, %v285, 0
        %v440 = vsel %vm321, %v286, 0
        %v443 = vsel %vm321, %v287, 0
        %v446 = vsel %vm321, %v288, 0
        %v449 = vsel %vm321, %v289, 0
        %v452 = vsel %vm321, %v290, 0
        %v455 = vsel %vm321, %v291, 0
        %v458 = vsel %vm321, %v292, 0
        %v461 = vsel %vm321, %v293, 0
        %v464 = vsel %vm321, %v294, 0
        %v467 = vsel %vm321, %v295, 0
        %v470 = vsel %vm321, %v296, 0
        %v473 = vsel %vm321, %v297, 0
        %v476 = vsel %vm321, %v298, 0
        %v479 = vsel %vm321, %v299, 0
        %v482 = vsel %vm321, %v300, 0
        %v485 = vsel %vm321, %v301, 0
        %v488 = vsel %vm321, %v302, 0
        %v491 = vsel %vm321, %v303, 0
        %v494 = vsel %vm321, %v304, 0
        %v497 = vsel %vm321, %v305, 0
        %v500 = vsel %vm321, %v306, 0
        %v503 = vsel %vm321, %v307, 0
        %v506 = vsel %vm321, %v308, 0
        %v509 = vsel %vm321, %v309, 0
        %v512 = vsel %vm321, %v310, 0
        %vm514 = vcmask 1044480
        %v516 = vsel %vm514, %v311, 0
        %518 = vmatprep.subr.mxu0 0.0
        %519 = vmatpush1.msra.mxu0 0.0
        %520 = vmatprep.subr.mxu0 0.0
        %521 = vmatpush1.msra.mxu0 0.0
        %522 = vmatprep.subr.mxu0 0.0
        %523 = vmatpush1.msra.mxu0 0.0
        %524 = vmatprep.subr.mxu0 0.0
        %525 = vmatpush1.msra.mxu0 0.0
        %526 = vmatprep.subr.mxu0 0.0
        %527 = vmatpush1.msra.mxu0 0.0
        %528 = vmatprep.subr.mxu0 0.0
        %529 = vmatpush1.msra.mxu0 0.0
        %530 = vmatprep.subr.mxu0 0.0
        %531 = vmatpush1.msra.mxu0 0.0
        %532 = vmatprep.subr.mxu0 0.0
        %533 = vmatpush1.msra.mxu0 0.0
        %534 = vmatprep.subr.mxu0 0.0
        %535 = vmatpush1.msra.mxu0 0.0
        %536 = vmatprep.subr.mxu0 0.0
        %537 = vmatpush1.msra.mxu0 0.0
        %538 = vmatprep.subr.mxu0 0.0
        %539 = vmatpush1.msra.mxu0 0.0
        %540 = vmatprep.subr.mxu0 0.0
        %541 = vmatpush1.msra.mxu0 0.0
        %542 = vmatprep.subr.mxu0 0.0
        %543 = vmatpush1.msra.mxu0 0.0
        %544 = vmatprep.subr.mxu0 0.0
        %545 = vmatpush1.msra.mxu0 0.0
        %546 = vmatprep.subr.mxu0 0.0
        %547 = vmatpush1.msra.mxu0 0.0
        %548 = vmatprep.subr.mxu0 0.0
        %549 = vmatpush1.msra.mxu0 %v516
        %550 = vmatprep.subr.mxu0 0.0
        %551 = vmatpush2.msra.mxu0 0.0
        %552 = vmatprep.subr.mxu0 0.0
        %553 = vmatpush2.msra.mxu0 0.0
        %554 = vmatprep.subr.mxu0 0.0
        %555 = vmatpush2.msra.mxu0 0.0
        %556 = vmatprep.subr.mxu0 0.0
        %557 = vmatpush2.msra.mxu0 0.0
        %558 = vmatprep.subr.mxu0 0.0
        %559 = vmatpush2.msra.mxu0 0.0
        %560 = vmatprep.subr.mxu0 0.0
        %561 = vmatpush2.msra.mxu0 0.0
        %562 = vmatprep.subr.mxu0 0.0
        %563 = vmatpush2.msra.mxu0 0.0
        %564 = vmatprep.subr.mxu0 0.0
        %565 = vmatpush2.msra.mxu0 0.0
        %566 = vmatprep.subr.mxu0 0.0
        %567 = vmatpush2.msra.mxu0 0.0
        %568 = vmatprep.subr.mxu0 0.0
        %569 = vmatpush2.msra.mxu0 0.0
        %570 = vmatprep.subr.mxu0 0.0
        %571 = vmatpush2.msra.mxu0 0.0
        %572 = vmatprep.subr.mxu0 0.0
        %573 = vmatpush2.msra.mxu0 0.0
        %574 = vmatprep.subr.mxu0 0.0
        %575 = vmatpush2.msra.mxu0 0.0
        %576 = vmatprep.subr.mxu0 0.0
        %577 = vmatpush2.msra.mxu0 0.0
        %578 = vmatprep.subr.mxu0 0.0
        %579 = vmatpush2.msra.mxu0 0.0
        %580 = vmatprep.subr.mxu0 0.0
        %581 = vmatpush2.msra.mxu0 0.0
        %582 = vmatprep.mubr.f32.mxu0 0.0
        %583 = vmatmul.mubr.f32.gmra.mxu0 %v323
        %v584 = vpop.f32.mrf.mxu0
        %v585 = vadd.f32 %v319, %v584
        %v586 = vpop.f32.mrf.mxu0
        %587 = vmatprep.mubr.f32.mxu0 0.0
        %588 = vmatmul.mubr.f32.gmra.mxu0 %v326
        %v589 = vpop.f32.mrf.mxu0
        %v590 = vadd.f32 %v319, %v589
        %v591 = vpop.f32.mrf.mxu0
        %592 = vmatprep.mubr.f32.mxu0 0.0
        %593 = vmatmul.mubr.f32.gmra.mxu0 %v329
        %v594 = vpop.f32.mrf.mxu0
        %v595 = vadd.f32 %v319, %v594
        %v596 = vpop.f32.mrf.mxu0
        %597 = vmatprep.mubr.f32.mxu0 0.0
        %598 = vmatmul.mubr.f32.gmra.mxu0 %v332
        %v599 = vpop.f32.mrf.mxu0
        %v600 = vadd.f32 %v319, %v599
        %v601 = vpop.f32.mrf.mxu0
        %602 = vmatprep.mubr.f32.mxu0 0.0
        %603 = vmatmul.mubr.f32.gmra.mxu0 %v335
        %v604 = vpop.f32.mrf.mxu0
        %v605 = vadd.f32 %v319, %v604
        %v606 = vpop.f32.mrf.mxu0
        %607 = vmatprep.mubr.f32.mxu0 0.0
        %608 = vmatmul.mubr.f32.gmra.mxu0 %v338
        %v609 = vpop.f32.mrf.mxu0
        %v610 = vadd.f32 %v319, %v609
        %v611 = vpop.f32.mrf.mxu0
        %612 = vmatprep.mubr.f32.mxu0 0.0
        %613 = vmatmul.mubr.f32.gmra.mxu0 %v341
        %v614 = vpop.f32.mrf.mxu0
        %v615 = vadd.f32 %v319, %v614
        %v616 = vpop.f32.mrf.mxu0
        %617 = vmatprep.mubr.f32.mxu0 0.0
        %618 = vmatmul.mubr.f32.gmra.mxu0 %v344
        %v619 = vpop.f32.mrf.mxu0
        %v620 = vadd.f32 %v319, %v619
        %v621 = vpop.f32.mrf.mxu0
        %622 = vmatprep.mubr.f32.mxu0 0.0
        %623 = vmatmul.mubr.f32.gmra.mxu0 %v347
        %v624 = vpop.f32.mrf.mxu0
        %v625 = vadd.f32 %v319, %v624
        %v626 = vpop.f32.mrf.mxu0
        %627 = vmatprep.mubr.f32.mxu0 0.0
        %628 = vmatmul.mubr.f32.gmra.mxu0 %v350
        %v629 = vpop.f32.mrf.mxu0
        %v630 = vadd.f32 %v319, %v629
        %v631 = vpop.f32.mrf.mxu0
        %632 = vmatprep.mubr.f32.mxu0 0.0
        %633 = vmatmul.mubr.f32.gmra.mxu0 %v353
        %v634 = vpop.f32.mrf.mxu0
        %v635 = vadd.f32 %v319, %v634
        %v636 = vpop.f32.mrf.mxu0
        %637 = vmatprep.mubr.f32.mxu0 0.0
        %638 = vmatmul.mubr.f32.gmra.mxu0 %v356
        %v639 = vpop.f32.mrf.mxu0
        %v640 = vadd.f32 %v319, %v639
        %v641 = vpop.f32.mrf.mxu0
        %642 = vmatprep.mubr.f32.mxu0 0.0
        %643 = vmatmul.mubr.f32.gmra.mxu0 %v359
        %v644 = vpop.f32.mrf.mxu0
        %v645 = vadd.f32 %v319, %v644
        %v646 = vpop.f32.mrf.mxu0
        %647 = vmatprep.mubr.f32.mxu0 0.0
        %648 = vmatmul.mubr.f32.gmra.mxu0 %v362
        %v649 = vpop.f32.mrf.mxu0
        %v650 = vadd.f32 %v319, %v649
        %v651 = vpop.f32.mrf.mxu0
        %652 = vmatprep.mubr.f32.mxu0 0.0
        %653 = vmatmul.mubr.f32.gmra.mxu0 %v365
        %v654 = vpop.f32.mrf.mxu0
        %v655 = vadd.f32 %v319, %v654
        %v656 = vpop.f32.mrf.mxu0
        %657 = vmatprep.mubr.f32.mxu0 0.0
        %658 = vmatmul.mubr.f32.gmra.mxu0 %v368
        %v659 = vpop.f32.mrf.mxu0
        %v660 = vadd.f32 %v319, %v659
        %v661 = vpop.f32.mrf.mxu0
        %662 = vmatprep.mubr.f32.mxu0 0.0
        %663 = vmatmul.mubr.f32.gmra.mxu0 %v371
        %v664 = vpop.f32.mrf.mxu0
        %v665 = vadd.f32 %v319, %v664
        %v666 = vpop.f32.mrf.mxu0
        %667 = vmatprep.mubr.f32.mxu0 0.0
        %668 = vmatmul.mubr.f32.gmra.mxu0 %v374
        %v669 = vpop.f32.mrf.mxu0
        %v670 = vadd.f32 %v319, %v669
        %v671 = vpop.f32.mrf.mxu0
        %672 = vmatprep.mubr.f32.mxu0 0.0
        %673 = vmatmul.mubr.f32.gmra.mxu0 %v377
        %v674 = vpop.f32.mrf.mxu0
        %v675 = vadd.f32 %v319, %v674
        %v676 = vpop.f32.mrf.mxu0
        %677 = vmatprep.mubr.f32.mxu0 0.0
        %678 = vmatmul.mubr.f32.gmra.mxu0 %v380
        %v679 = vpop.f32.mrf.mxu0
        %v680 = vadd.f32 %v319, %v679
        %v681 = vpop.f32.mrf.mxu0
        %682 = vmatprep.mubr.f32.mxu0 0.0
        %683 = vmatmul.mubr.f32.gmra.mxu0 %v383
        %v684 = vpop.f32.mrf.mxu0
        %v685 = vadd.f32 %v319, %v684
        %v686 = vpop.f32.mrf.mxu0
        %687 = vmatprep.mubr.f32.mxu0 0.0
        %688 = vmatmul.mubr.f32.gmra.mxu0 %v386
        %v689 = vpop.f32.mrf.mxu0
        %v690 = vadd.f32 %v319, %v689
        %v691 = vpop.f32.mrf.mxu0
        %692 = vmatprep.mubr.f32.mxu0 0.0
        %693 = vmatmul.mubr.f32.gmra.mxu0 %v389
        %v694 = vpop.f32.mrf.mxu0
        %v695 = vadd.f32 %v319, %v694
        %v696 = vpop.f32.mrf.mxu0
        %697 = vmatprep.mubr.f32.mxu0 0.0
        %698 = vmatmul.mubr.f32.gmra.mxu0 %v392
        %v699 = vpop.f32.mrf.mxu0
        %v700 = vadd.f32 %v319, %v699
        %v701 = vpop.f32.mrf.mxu0
        %702 = vmatprep.mubr.f32.mxu0 0.0
        %703 = vmatmul.mubr.f32.gmra.mxu0 %v395
        %v704 = vpop.f32.mrf.mxu0
        %v705 = vadd.f32 %v319, %v704
        %v706 = vpop.f32.mrf.mxu0
        %707 = vmatprep.mubr.f32.mxu0 0.0
        %708 = vmatmul.mubr.f32.gmra.mxu0 %v398
        %v709 = vpop.f32.mrf.mxu0
        %v710 = vadd.f32 %v319, %v709
        %v711 = vpop.f32.mrf.mxu0
        %712 = vmatprep.mubr.f32.mxu0 0.0
        %713 = vmatmul.mubr.f32.gmra.mxu0 %v401
        %v714 = vpop.f32.mrf.mxu0
        %v715 = vadd.f32 %v319, %v714
        %v716 = vpop.f32.mrf.mxu0
        %717 = vmatprep.mubr.f32.mxu0 0.0
        %718 = vmatmul.mubr.f32.gmra.mxu0 %v404
        %v719 = vpop.f32.mrf.mxu0
        %v720 = vadd.f32 %v319, %v719
        %v721 = vpop.f32.mrf.mxu0
        %722 = vmatprep.mubr.f32.mxu0 0.0
        %723 = vmatmul.mubr.f32.gmra.mxu0 %v407
        %v724 = vpop.f32.mrf.mxu0
        %v725 = vadd.f32 %v319, %v724
        %v726 = vpop.f32.mrf.mxu0
        %727 = vmatprep.mubr.f32.mxu0 0.0
        %728 = vmatmul.mubr.f32.gmra.mxu0 %v410
        %v729 = vpop.f32.mrf.mxu0
        %v730 = vadd.f32 %v319, %v729
        %v731 = vpop.f32.mrf.mxu0
        %732 = vmatprep.mubr.f32.mxu0 0.0
        %733 = vmatmul.mubr.f32.gmra.mxu0 %v413
        %v734 = vpop.f32.mrf.mxu0
        %v735 = vadd.f32 %v319, %v734
        %v736 = vpop.f32.mrf.mxu0
        %737 = vmatprep.mubr.f32.mxu0 0.0
        %738 = vmatmul.mubr.f32.gmra.mxu0 %v416
        %v739 = vpop.f32.mrf.mxu0
        %v740 = vadd.f32 %v319, %v739
        %v741 = vpop.f32.mrf.mxu0
        %742 = vmatprep.mubr.f32.mxu0 0.0
        %743 = vmatmul.mubr.f32.gmra.mxu0 %v419
        %v744 = vpop.f32.mrf.mxu0
        %v745 = vadd.f32 %v319, %v744
        %v746 = vpop.f32.mrf.mxu0
        %747 = vmatprep.mubr.f32.mxu0 0.0
        %748 = vmatmul.mubr.f32.gmra.mxu0 %v422
        %v749 = vpop.f32.mrf.mxu0
        %v750 = vadd.f32 %v319, %v749
        %v751 = vpop.f32.mrf.mxu0
        %752 = vmatprep.mubr.f32.mxu0 0.0
        %753 = vmatmul.mubr.f32.gmra.mxu0 %v425
        %v754 = vpop.f32.mrf.mxu0
        %v755 = vadd.f32 %v319, %v754
        %v756 = vpop.f32.mrf.mxu0
        %757 = vmatprep.mubr.f32.mxu0 0.0
        %758 = vmatmul.mubr.f32.gmra.mxu0 %v428
        %v759 = vpop.f32.mrf.mxu0
        %v760 = vadd.f32 %v319, %v759
        %v761 = vpop.f32.mrf.mxu0
        %762 = vmatprep.mubr.f32.mxu0 0.0
        %763 = vmatmul.mubr.f32.gmra.mxu0 %v431
        %v764 = vpop.f32.mrf.mxu0
        %v765 = vadd.f32 %v319, %v764
        %v766 = vpop.f32.mrf.mxu0
        %767 = vmatprep.mubr.f32.mxu0 0.0
        %768 = vmatmul.mubr.f32.gmra.mxu0 %v434
        %v769 = vpop.f32.mrf.mxu0
        %v770 = vadd.f32 %v319, %v769
        %v771 = vpop.f32.mrf.mxu0
        %772 = vmatprep.mubr.f32.mxu0 0.0
        %773 = vmatmul.mubr.f32.gmra.mxu0 %v437
        %v774 = vpop.f32.mrf.mxu0
        %v775 = vadd.f32 %v319, %v774
        %v776 = vpop.f32.mrf.mxu0
        %777 = vmatprep.mubr.f32.mxu0 0.0
        %778 = vmatmul.mubr.f32.gmra.mxu0 %v440
        %v779 = vpop.f32.mrf.mxu0
        %v780 = vadd.f32 %v319, %v779
        %v781 = vpop.f32.mrf.mxu0
        %782 = vmatprep.mubr.f32.mxu0 0.0
        %783 = vmatmul.mubr.f32.gmra.mxu0 %v443
        %v784 = vpop.f32.mrf.mxu0
        %v785 = vadd.f32 %v319, %v784
        %v786 = vpop.f32.mrf.mxu0
        %787 = vmatprep.mubr.f32.mxu0 0.0
        %788 = vmatmul.mubr.f32.gmra.mxu0 %v446
        %v789 = vpop.f32.mrf.mxu0
        %v790 = vadd.f32 %v319, %v789
        %v791 = vpop.f32.mrf.mxu0
        %792 = vmatprep.mubr.f32.mxu0 0.0
        %793 = vmatmul.mubr.f32.gmra.mxu0 %v449
        %v794 = vpop.f32.mrf.mxu0
        %v795 = vadd.f32 %v319, %v794
        %v796 = vpop.f32.mrf.mxu0
        %797 = vmatprep.mubr.f32.mxu0 0.0
        %798 = vmatmul.mubr.f32.gmra.mxu0 %v452
        %v799 = vpop.f32.mrf.mxu0
        %v800 = vadd.f32 %v319, %v799
        %v801 = vpop.f32.mrf.mxu0
        %802 = vmatprep.mubr.f32.mxu0 0.0
        %803 = vmatmul.mubr.f32.gmra.mxu0 %v455
        %v804 = vpop.f32.mrf.mxu0
        %v805 = vadd.f32 %v319, %v804
        %v806 = vpop.f32.mrf.mxu0
        %807 = vmatprep.mubr.f32.mxu0 0.0
        %808 = vmatmul.mubr.f32.gmra.mxu0 %v458
        %v809 = vpop.f32.mrf.mxu0
        %v810 = vadd.f32 %v319, %v809
        %v811 = vpop.f32.mrf.mxu0
        %812 = vmatprep.mubr.f32.mxu0 0.0
        %813 = vmatmul.mubr.f32.gmra.mxu0 %v461
        %v814 = vpop.f32.mrf.mxu0
        %v815 = vadd.f32 %v319, %v814
        %v816 = vpop.f32.mrf.mxu0
        %817 = vmatprep.mubr.f32.mxu0 0.0
        %818 = vmatmul.mubr.f32.gmra.mxu0 %v464
        %v819 = vpop.f32.mrf.mxu0
        %v820 = vadd.f32 %v319, %v819
        %v821 = vpop.f32.mrf.mxu0
        %822 = vmatprep.mubr.f32.mxu0 0.0
        %823 = vmatmul.mubr.f32.gmra.mxu0 %v467
        %v824 = vpop.f32.mrf.mxu0
        %v825 = vadd.f32 %v319, %v824
        %v826 = vpop.f32.mrf.mxu0
        %827 = vmatprep.mubr.f32.mxu0 0.0
        %828 = vmatmul.mubr.f32.gmra.mxu0 %v470
        %v829 = vpop.f32.mrf.mxu0
        %v830 = vadd.f32 %v319, %v829
        %v831 = vpop.f32.mrf.mxu0
        %832 = vmatprep.mubr.f32.mxu0 0.0
        %833 = vmatmul.mubr.f32.gmra.mxu0 %v473
        %v834 = vpop.f32.mrf.mxu0
        %v835 = vadd.f32 %v319, %v834
        %v836 = vpop.f32.mrf.mxu0
        %837 = vmatprep.mubr.f32.mxu0 0.0
        %838 = vmatmul.mubr.f32.gmra.mxu0 %v476
        %v839 = vpop.f32.mrf.mxu0
        %v840 = vadd.f32 %v319, %v839
        %v841 = vpop.f32.mrf.mxu0
        %842 = vmatprep.mubr.f32.mxu0 0.0
        %843 = vmatmul.mubr.f32.gmra.mxu0 %v479
        %v844 = vpop.f32.mrf.mxu0
        %v845 = vadd.f32 %v319, %v844
        %v846 = vpop.f32.mrf.mxu0
        %847 = vmatprep.mubr.f32.mxu0 0.0
        %848 = vmatmul.mubr.f32.gmra.mxu0 %v482
        %v849 = vpop.f32.mrf.mxu0
        %v850 = vadd.f32 %v319, %v849
        %v851 = vpop.f32.mrf.mxu0
        %852 = vmatprep.mubr.f32.mxu0 0.0
        %853 = vmatmul.mubr.f32.gmra.mxu0 %v485
        %v854 = vpop.f32.mrf.mxu0
        %v855 = vadd.f32 %v319, %v854
        %v856 = vpop.f32.mrf.mxu0
        %857 = vmatprep.mubr.f32.mxu0 0.0
        %858 = vmatmul.mubr.f32.gmra.mxu0 %v488
        %v859 = vpop.f32.mrf.mxu0
        %v860 = vadd.f32 %v319, %v859
        %v861 = vpop.f32.mrf.mxu0
        %862 = vmatprep.mubr.f32.mxu0 0.0
        %863 = vmatmul.mubr.f32.gmra.mxu0 %v491
        %v864 = vpop.f32.mrf.mxu0
        %v865 = vadd.f32 %v319, %v864
        %v866 = vpop.f32.mrf.mxu0
        %867 = vmatprep.mubr.f32.mxu0 0.0
        %868 = vmatmul.mubr.f32.gmra.mxu0 %v494
        %v869 = vpop.f32.mrf.mxu0
        %v870 = vadd.f32 %v319, %v869
        %v871 = vpop.f32.mrf.mxu0
        %872 = vmatprep.mubr.f32.mxu0 0.0
        %873 = vmatmul.mubr.f32.gmra.mxu0 %v497
        %v874 = vpop.f32.mrf.mxu0
        %v875 = vadd.f32 %v319, %v874
        %v876 = vpop.f32.mrf.mxu0
        %877 = vmatprep.mubr.f32.mxu0 0.0
        %878 = vmatmul.mubr.f32.gmra.mxu0 %v500
        %v879 = vpop.f32.mrf.mxu0
        %v880 = vadd.f32 %v319, %v879
        %v881 = vpop.f32.mrf.mxu0
        %882 = vmatprep.mubr.f32.mxu0 0.0
        %883 = vmatmul.mubr.f32.gmra.mxu0 %v503
        %v884 = vpop.f32.mrf.mxu0
        %v885 = vadd.f32 %v319, %v884
        %v886 = vpop.f32.mrf.mxu0
        %887 = vmatprep.mubr.f32.mxu0 0.0
        %888 = vmatmul.mubr.f32.gmra.mxu0 %v506
        %v889 = vpop.f32.mrf.mxu0
        %v890 = vadd.f32 %v319, %v889
        %v891 = vpop.f32.mrf.mxu0
        %892 = vmatprep.mubr.f32.mxu0 0.0
        %893 = vmatmul.mubr.f32.gmra.mxu0 %v509
        %v894 = vpop.f32.mrf.mxu0
        %v895 = vadd.f32 %v319, %v894
        %v896 = vpop.f32.mrf.mxu0
        %897 = vmatprep.mubr.f32.mxu0 0.0
        %898 = vmatmul.mubr.f32.gmra.mxu0 %v512
        %v899 = vpop.f32.mrf.mxu0
        %v900 = vadd.f32 %v319, %v899
        %v901 = vpop.f32.mrf.mxu0
        %902 = vdwg.mxu0
        %v903 = vmax.f32 %v585, 0.0
        %v904 = vmax.f32 %v590, 0.0
        %v905 = vmax.f32 %v595, 0.0
        %v906 = vmax.f32 %v600, 0.0
        %v907 = vmax.f32 %v605, 0.0
        %v908 = vmax.f32 %v610, 0.0
        %v909 = vmax.f32 %v615, 0.0
        %v910 = vmax.f32 %v620, 0.0
        %v911 = vmax.f32 %v625, 0.0
        %v912 = vmax.f32 %v630, 0.0
        %v913 = vmax.f32 %v635, 0.0
        %v914 = vmax.f32 %v640, 0.0
        %v915 = vmax.f32 %v645, 0.0
        %v916 = vmax.f32 %v650, 0.0
        %v917 = vmax.f32 %v655, 0.0
        %v918 = vmax.f32 %v660, 0.0
        %v919 = vmax.f32 %v665, 0.0
        %v920 = vmax.f32 %v670, 0.0
        %v921 = vmax.f32 %v675, 0.0
        %v922 = vmax.f32 %v680, 0.0
        %v923 = vmax.f32 %v685, 0.0
        %v924 = vmax.f32 %v690, 0.0
        %v925 = vmax.f32 %v695, 0.0
        %v926 = vmax.f32 %v700, 0.0
        %v927 = vmax.f32 %v705, 0.0
        %v928 = vmax.f32 %v710, 0.0
        %v929 = vmax.f32 %v715, 0.0
        %v930 = vmax.f32 %v720, 0.0
        %v931 = vmax.f32 %v725, 0.0
        %v932 = vmax.f32 %v730, 0.0
        %v933 = vmax.f32 %v735, 0.0
        %v934 = vmax.f32 %v740, 0.0
        %v935 = vmax.f32 %v745, 0.0
        %v936 = vmax.f32 %v750, 0.0
        %v937 = vmax.f32 %v755, 0.0
        %v938 = vmax.f32 %v760, 0.0
        %v939 = vmax.f32 %v765, 0.0
        %v940 = vmax.f32 %v770, 0.0
        %v941 = vmax.f32 %v775, 0.0
        %v942 = vmax.f32 %v780, 0.0
        %v943 = vmax.f32 %v785, 0.0
        %v944 = vmax.f32 %v790, 0.0
        %v945 = vmax.f32 %v795, 0.0
        %v946 = vmax.f32 %v800, 0.0
        %v947 = vmax.f32 %v805, 0.0
        %v948 = vmax.f32 %v810, 0.0
        %v949 = vmax.f32 %v815, 0.0
        %v950 = vmax.f32 %v820, 0.0
        %v951 = vmax.f32 %v825, 0.0
        %v952 = vmax.f32 %v830, 0.0
        %v953 = vmax.f32 %v835, 0.0
        %v954 = vmax.f32 %v840, 0.0
        %v955 = vmax.f32 %v845, 0.0
        %v956 = vmax.f32 %v850, 0.0
        %v957 = vmax.f32 %v855, 0.0
        %v958 = vmax.f32 %v860, 0.0
        %v959 = vmax.f32 %v865, 0.0
        %v960 = vmax.f32 %v870, 0.0
        %v961 = vmax.f32 %v875, 0.0
        %v962 = vmax.f32 %v880, 0.0
        %v963 = vmax.f32 %v885, 0.0
        %v964 = vmax.f32 %v890, 0.0
        %v965 = vmax.f32 %v895, 0.0
        %v966 = vmax.f32 %v900, 0.0
        %v967 = vstv %s314
        %vm968 = vcmask 97280
        %v970 = vsel %vm968, %v313, 0
        %v973 = vsel %vm968, %v903, 0
        %v976 = vsel %vm968, %v904, 0
        %v979 = vsel %vm968, %v905, 0
        %v982 = vsel %vm968, %v906, 0
        %v985 = vsel %vm968, %v907, 0
        %v988 = vsel %vm968, %v908, 0
        %v991 = vsel %vm968, %v909, 0
        %v994 = vsel %vm968, %v910, 0
        %v997 = vsel %vm968, %v911, 0
        %v1000 = vsel %vm968, %v912, 0
        %v1003 = vsel %vm968, %v913, 0
        %v1006 = vsel %vm968, %v914, 0
        %v1009 = vsel %vm968, %v915, 0
        %v1012 = vsel %vm968, %v916, 0
        %v1015 = vsel %vm968, %v917, 0
        %v1018 = vsel %vm968, %v918, 0
        %v1021 = vsel %vm968, %v919, 0
        %v1024 = vsel %vm968, %v920, 0
        %v1027 = vsel %vm968, %v921, 0
        %v1030 = vsel %vm968, %v922, 0
        %v1033 = vsel %vm968, %v923, 0
        %v1036 = vsel %vm968, %v924, 0
        %v1039 = vsel %vm968, %v925, 0
        %v1042 = vsel %vm968, %v926, 0
        %v1045 = vsel %vm968, %v927, 0
        %v1048 = vsel %vm968, %v928, 0
        %v1051 = vsel %vm968, %v929, 0
        %v1054 = vsel %vm968, %v930, 0
        %v1057 = vsel %vm968, %v931, 0
        %v1060 = vsel %vm968, %v932, 0
        %v1063 = vsel %vm968, %v933, 0
        %v1066 = vsel %vm968, %v934, 0
        %v1069 = vsel %vm968, %v935, 0
        %v1072 = vsel %vm968, %v936, 0
        %v1075 = vsel %vm968, %v937, 0
        %v1078 = vsel %vm968, %v938, 0
        %v1081 = vsel %vm968, %v939, 0
        %v1084 = vsel %vm968, %v940, 0
        %v1087 = vsel %vm968, %v941, 0
        %v1090 = vsel %vm968, %v942, 0
        %v1093 = vsel %vm968, %v943, 0
        %v1096 = vsel %vm968, %v944, 0
        %v1099 = vsel %vm968, %v945, 0
        %v1102 = vsel %vm968, %v946, 0
        %v1105 = vsel %vm968, %v947, 0
        %v1108 = vsel %vm968, %v948, 0
        %v1111 = vsel %vm968, %v949, 0
        %v1114 = vsel %vm968, %v950, 0
        %v1117 = vsel %vm968, %v951, 0
        %v1120 = vsel %vm968, %v952, 0
        %v1123 = vsel %vm968, %v953, 0
        %v1126 = vsel %vm968, %v954, 0
        %v1129 = vsel %vm968, %v955, 0
        %v1132 = vsel %vm968, %v956, 0
        %v1135 = vsel %vm968, %v957, 0
        %v1138 = vsel %vm968, %v958, 0
        %v1141 = vsel %vm968, %v959, 0
        %v1144 = vsel %vm968, %v960, 0
        %v1147 = vsel %vm968, %v961, 0
        %v1150 = vsel %vm968, %v962, 0
        %v1153 = vsel %vm968, %v963, 0
        %v1156 = vsel %vm968, %v964, 0
        %v1159 = vsel %vm968, %v965, 0
        %v1162 = vsel %vm968, %v966, 0
        %1164 = vmatprep.subr.mxu0 0.0
        %1165 = vmatpush1.xpose.msra.mxu0 %v1018
        %1166 = vmatprep.subr.mxu0 0.0
        %1167 = vmatpush1.xpose.msra.mxu0 %v1015
        %1168 = vmatprep.subr.mxu0 0.0
        %1169 = vmatpush1.xpose.msra.mxu0 %v1012
        %1170 = vmatprep.subr.mxu0 0.0
        %1171 = vmatpush1.xpose.msra.mxu0 %v1009
        %1172 = vmatprep.subr.mxu0 0.0
        %1173 = vmatpush1.xpose.msra.mxu0 %v1006
        %1174 = vmatprep.subr.mxu0 0.0
        %1175 = vmatpush1.xpose.msra.mxu0 %v1003
        %1176 = vmatprep.subr.mxu0 0.0
        %1177 = vmatpush1.xpose.msra.mxu0 %v1000
        %1178 = vmatprep.subr.mxu0 0.0
        %1179 = vmatpush1.xpose.msra.mxu0 %v997
        %1180 = vmatprep.subr.mxu0 0.0
        %1181 = vmatpush1.xpose.msra.mxu0 %v994
        %1182 = vmatprep.subr.mxu0 0.0
        %1183 = vmatpush1.xpose.msra.mxu0 %v991
        %1184 = vmatprep.subr.mxu0 0.0
        %1185 = vmatpush1.xpose.msra.mxu0 %v988
        %1186 = vmatprep.subr.mxu0 0.0
        %1187 = vmatpush1.xpose.msra.mxu0 %v985
        %1188 = vmatprep.subr.mxu0 0.0
        %1189 = vmatpush1.xpose.msra.mxu0 %v982
        %1190 = vmatprep.subr.mxu0 0.0
        %1191 = vmatpush1.xpose.msra.mxu0 %v979
        %1192 = vmatprep.subr.mxu0 0.0
        %1193 = vmatpush1.xpose.msra.mxu0 %v976
        %1194 = vmatprep.subr.mxu0 0.0
        %1195 = vmatpush1.xpose.msra.mxu0 %v973
        %1196 = vmatprep.subr.mxu0 0.0
        %1197 = vmatpush2.xpose.msra.mxu0 %v1066
        %1198 = vmatprep.subr.mxu0 0.0
        %1199 = vmatpush2.xpose.msra.mxu0 %v1063
        %1200 = vmatprep.subr.mxu0 0.0
        %1201 = vmatpush2.xpose.msra.mxu0 %v1060
        %1202 = vmatprep.subr.mxu0 0.0
        %1203 = vmatpush2.xpose.msra.mxu0 %v1057
        %1204 = vmatprep.subr.mxu0 0.0
        %1205 = vmatpush2.xpose.msra.mxu0 %v1054
        %1206 = vmatprep.subr.mxu0 0.0
        %1207 = vmatpush2.xpose.msra.mxu0 %v1051
        %1208 = vmatprep.subr.mxu0 0.0
        %1209 = vmatpush2.xpose.msra.mxu0 %v1048
        %1210 = vmatprep.subr.mxu0 0.0
        %1211 = vmatpush2.xpose.msra.mxu0 %v1045
        %1212 = vmatprep.subr.mxu0 0.0
        %1213 = vmatpush2.xpose.msra.mxu0 %v1042
        %1214 = vmatprep.subr.mxu0 0.0
        %1215 = vmatpush2.xpose.msra.mxu0 %v1039
        %1216 = vmatprep.subr.mxu0 0.0
        %1217 = vmatpush2.xpose.msra.mxu0 %v1036
        %1218 = vmatprep.subr.mxu0 0.0
        %1219 = vmatpush2.xpose.msra.mxu0 %v1033
        %1220 = vmatprep.subr.mxu0 0.0
        %1221 = vmatpush2.xpose.msra.mxu0 %v1030
        %1222 = vmatprep.subr.mxu0 0.0
        %1223 = vmatpush2.xpose.msra.mxu0 %v1027
        %1224 = vmatprep.subr.mxu0 0.0
        %1225 = vmatpush2.xpose.msra.mxu0 %v1024
        %1226 = vmatprep.subr.mxu0 0.0
        %1227 = vmatpush2.xpose.msra.mxu0 %v1021
        %1228 = vmatprep.mubr.f32.mxu0 0.0
        %1229 = vmatmul.mubr.f32.gmra.mxu0 %v970
        %v1230 = vpop.f32.mrf.mxu0
        %v1231 = vadd.f32 %v967, %v1230
        %v1232 = vpop.f32.mrf.mxu0
        %v1233 = vadd.f32 %v967, %v1232
        %1234 = vdwg.mxu0
        %1235 = vmatprep.subr.mxu0 0.0
        %1236 = vmatpush1.xpose.msra.mxu0 %v1114
        %1237 = vmatprep.subr.mxu0 0.0
        %1238 = vmatpush1.xpose.msra.mxu0 %v1111
        %1239 = vmatprep.subr.mxu0 0.0
        %1240 = vmatpush1.xpose.msra.mxu0 %v1108
        %1241 = vmatprep.subr.mxu0 0.0
        %1242 = vmatpush1.xpose.msra.mxu0 %v1105
        %1243 = vmatprep.subr.mxu0 0.0
        %1244 = vmatpush1.xpose.msra.mxu0 %v1102
        %1245 = vmatprep.subr.mxu0 0.0
        %1246 = vmatpush1.xpose.msra.mxu0 %v1099
        %1247 = vmatprep.subr.mxu0 0.0
        %1248 = vmatpush1.xpose.msra.mxu0 %v1096
        %1249 = vmatprep.subr.mxu0 0.0
        %1250 = vmatpush1.xpose.msra.mxu0 %v1093
        %1251 = vmatprep.subr.mxu0 0.0
        %1252 = vmatpush1.xpose.msra.mxu0 %v1090
        %1253 = vmatprep.subr.mxu0 0.0
        %1254 = vmatpush1.xpose.msra.mxu0 %v1087
        %1255 = vmatprep.subr.mxu0 0.0
        %1256 = vmatpush1.xpose.msra.mxu0 %v1084
        %1257 = vmatprep.subr.mxu0 0.0
        %1258 = vmatpush1.xpose.msra.mxu0 %v1081
        %1259 = vmatprep.subr.mxu0 0.0
        %1260 = vmatpush1.xpose.msra.mxu0 %v1078
        %1261 = vmatprep.subr.mxu0 0.0
        %1262 = vmatpush1.xpose.msra.mxu0 %v1075
        %1263 = vmatprep.subr.mxu0 0.0
        %1264 = vmatpush1.xpose.msra.mxu0 %v1072
        %1265 = vmatprep.subr.mxu0 0.0
        %1266 = vmatpush1.xpose.msra.mxu0 %v1069
        %1267 = vmatprep.subr.mxu0 0.0
        %1268 = vmatpush2.xpose.msra.mxu0 %v1162
        %1269 = vmatprep.subr.mxu0 0.0
        %1270 = vmatpush2.xpose.msra.mxu0 %v1159
        %1271 = vmatprep.subr.mxu0 0.0
        %1272 = vmatpush2.xpose.msra.mxu0 %v1156
        %1273 = vmatprep.subr.mxu0 0.0
        %1274 = vmatpush2.xpose.msra.mxu0 %v1153
        %1275 = vmatprep.subr.mxu0 0.0
        %1276 = vmatpush2.xpose.msra.mxu0 %v1150
        %1277 = vmatprep.subr.mxu0 0.0
        %1278 = vmatpush2.xpose.msra.mxu0 %v1147
        %1279 = vmatprep.subr.mxu0 0.0
        %1280 = vmatpush2.xpose.msra.mxu0 %v1144
        %1281 = vmatprep.subr.mxu0 0.0
        %1282 = vmatpush2.xpose.msra.mxu0 %v1141
        %1283 = vmatprep.subr.mxu0 0.0
        %1284 = vmatpush2.xpose.msra.mxu0 %v1138
        %1285 = vmatprep.subr.mxu0 0.0
        %1286 = vmatpush2.xpose.msra.mxu0 %v1135
        %1287 = vmatprep.subr.mxu0 0.0
        %1288 = vmatpush2.xpose.msra.mxu0 %v1132
        %1289 = vmatprep.subr.mxu0 0.0
        %1290 = vmatpush2.xpose.msra.mxu0 %v1129
        %1291 = vmatprep.subr.mxu0 0.0
        %1292 = vmatpush2.xpose.msra.mxu0 %v1126
        %1293 = vmatprep.subr.mxu0 0.0
        %1294 = vmatpush2.xpose.msra.mxu0 %v1123
        %1295 = vmatprep.subr.mxu0 0.0
        %1296 = vmatpush2.xpose.msra.mxu0 %v1120
        %1297 = vmatprep.subr.mxu0 0.0
        %1298 = vmatpush2.xpose.msra.mxu0 %v1117
        %1299 = vmatprep.mubr.f32.mxu0 0.0
        %1300 = vmatmul.mubr.f32.gmra.mxu0 %v970
        %v1301 = vpop.f32.mrf.mxu0
        %v1302 = vadd.f32 %v967, %v1301
        %v1303 = vpop.f32.mrf.mxu0
        %v1304 = vadd.f32 %v967, %v1303
        %1305 = vdwg.mxu0
        %v1310 = vcombine.low %v1231, %v1233
        %v1311 = vcombine.low %v1302, %v1304
        %v1313 = vunpack.c.l.s4 1966171168
        %v1314 = vunpack.c.0.s8 %v1313
        %v1315 = vlaneseq
        %v1316 = vshrl.u32 %v1315, 7
        %v1317 = vsub.s32 %v1314, %v1316
        %v1318 = vrot.slane %v1310, %v1317
        %v1320 = vunpack.c.l.s4 1966171168
        %v1321 = vunpack.c.0.s8 %v1320
        %v1322 = vlaneseq
        %v1323 = vshrl.u32 %v1322, 7
        %v1324 = vsub.s32 %v1321, %v1323
        %v1325 = vrot.slane %v1311, %v1324
        %v1326 = vcombine.low %v1318, %v1325
        %v1328 = vunpack.c.l.s4 1966171168
        %v1329 = vunpack.c.0.s8 %v1328
        %v1330 = vlaneseq
        %v1331 = vshrl.u32 %v1330, 7
        %v1332 = vsub.s32 %v1329, %v1331
        %v1333 = vrot.slane %v1326, %v1332
        %v1335 = vlaneseq
        %vm1336 = vcmp.ge.s32.totalorder %v1335, 0
        %vm1337 = vcmp.lt.s32.totalorder %v1335, 512
        %vm1338 = vmand %vm1336, %vm1337
        %1339 = vst.msk [vmem:[%s231] sm:$0xf] %vm1338, %v1333
        %s1340 = sand.u32 %s138, 1
        %s1341 = scalar_lea.sflag [#allocation4], %s1340
        %s1342 = sand.u32 %s138, 1
        %s1343 = smul.addr %s1342, 4
        %s1344 = scalar_lea.vmem [#allocation3], %s1343
        // Predicated region
        $region41: #{tpu_custom_call.1} parent=39 // pred_check
          %p1345 = pneg %p148
        $region42: #{tpu_custom_call.1} parent=39 // pred_check_branch
          %1347 = sbr.rel (%p1345) target = $region44
        $region43: #{tpu_custom_call.1} parent=39 // pred_region
          %s1348 = smul.u32 4, %s20
          %s1350 = ssub.s32 64, 64
          %1351 = vsyncadd %s1341, %s1350
          %s1352 = smul.addr %s1348, 16
          %s1353 = scalar_lea.hbm %s5, %s1352
          %s1355 = sshll.u32 %s1344, 4
          %s1356 = int_to_ptr.vmem [resolvable:$true] %s1355
          %1358 = dma.vmem_to_hbm [thread:$0]  %s1356, 64, %s1353, %s1341
        $region44: #{tpu_custom_call.1} parent=39 // pred_fallthru
          _
      $region40: #{tpu_custom_call.1} parent=5 // pred_fallthru
        _
      %p1359 = scmp.le.s32.totalorder 2, %s15
      // Predicated region
      $region45: #{tpu_custom_call.1} parent=5 // pred_check
        %p1360 = pneg %p1359
      $region46: #{tpu_custom_call.1} parent=5 // pred_check_branch
        %1362 = sbr.rel (%p1360) target = $region48
      $region47: #{tpu_custom_call.1} parent=5 // pred_region
        %s1363 = ssub.s32 %s15, 2
        // Predicated region
        $region49: #{tpu_custom_call.1} parent=47 // pred_check
          %p1364 = pneg %p154
        $region50: #{tpu_custom_call.1} parent=47 // pred_check_branch
          %1366 = sbr.rel (%p1364) target = $region52
        $region51: #{tpu_custom_call.1} parent=47 // pred_region
          %s1367 = sand.u32 %s139, 1
          %s1368 = scalar_lea.sflag [#allocation4], %s1367
          %s1369 = sand.u32 %s139, 1
          %s1370 = smul.addr %s1369, 4
          %s1371 = scalar_lea.vmem [#allocation3], %s1370
          %1372 = dma.done %s1368, 64
        $region52: #{tpu_custom_call.1} parent=47 // pred_fallthru
          _
      $region48: #{tpu_custom_call.1} parent=5 // pred_fallthru
        _
    $region6: #{tpu_custom_call.1} parent=1 // loop_footer
      %s19 = sadd.s32 1, %s15
    $region7: #{tpu_custom_call.1} parent=1 // loop_footer_branch
      %14 = sbr.rel target = $region3
    $region8: #{tpu_custom_call.1} parent=1 // loop_exit
      _
    %1373 = vsyncpa [#allocation4], 1
    %s1374 = scalar_lea.sflag [#allocation4], 1
    %1375 = vsyncpa %s1374, 1

</llo_original>
